<compile_context>
chip_gen: v6e
topology: v6e:2x2x1
jax: 0.10.0
libtpu: 0.0.40
codegen_flags: <defaults>
</compile_context>

<pallas_src>
import jax
import jax.numpy as jnp
from jax.experimental import pallas as pl
from jax.experimental.pallas import tpu as pltpu

# Small synthetic dims consistent with the module's forward pass.
NUM_VOCAB = 64     # num_vocab
INPUT_SIZE = 32    # input_size (embedding dim)
HIDDEN = 32        # hidden_size
SRC_LEN = 8        # encoder_memory length S  (encoder_memory is [S, 2*H])
LANES = 128

# fused LSTM-gate input: [ctx (2H) | emb (I) | h (H)] must be exactly one vreg row
assert 2 * HIDDEN + INPUT_SIZE + HIDDEN == LANES
# packed output: [log_prob (V) | h_new (H) | c_new (H)]
OUT_COLS = NUM_VOCAB + 2 * HIDDEN
assert OUT_COLS <= LANES
# lane carrying the is_init flag inside the dynamic-state row
F_LANE = 2 * HIDDEN + INPUT_SIZE                # 96
assert F_LANE + 1 <= LANES

# Weight-slab row offsets (all multiples of 8 -> clean (8,128) tiles).
R_WINIT = 0                                    # (2H, 2H) block-diag [wi1 0; 0 wi2]
R_W1H = R_WINIT + 2 * HIDDEN                   # 64 : (H, H)   calcu_weight_1, hidden rows
R_W1E = R_W1H + HIDDEN                         # 96 : (2H, H)  calcu_weight_1, encoder rows
R_WG = R_W1E + 2 * HIDDEN                      # 160: (128,4H) fused [wih_ctx; wih_emb; whh]
R_WV = R_WG + LANES                            # 288: (H, V)   linear_vob
R_BIAS = R_WV + HIDDEN                         # 320: 8-row bias block
SLAB_ROWS = R_BIAS + 8                         # 328


def _decoder_kernel(state_ref, enc_ref, w_ref, out_ref, xbuf_ref):
    H, I, V = HIDDEN, INPUT_SIZE, NUM_VOCAB

    state = state_ref[...]                       # (1, 128) = [h | c | emb | flag | 0...]
    hc_raw = state[:, 0:2 * H]                   # (1, 2H)
    emb = state[:, 2 * H:2 * H + I]              # (1, I)
    f_init = state[:, F_LANE:F_LANE + 1]         # (1, 1), 0.0 or 1.0
    # TODO(synk): dropout on the embedded input is an eval-mode no-op here.

    biases = w_ref[R_BIAS:R_BIAS + 8, :]         # (8, 128) bias block, loaded once
    b_init = biases[0:1, :]                      # [bi1 | bi2 | 0...]
    b1 = biases[1:2, :]                          # [b1 | 0...]
    w2_row = biases[2:3, :]                      # [w2 | 0...]
    b2 = biases[3:4, 0:1]                        # (1, 1)
    b_lstm = biases[4:5, :]                      # (1, 4H) = full row
    bv = biases[5:6, :]                          # [bv | 0...]

    # is_init: tanh([h|c] @ blockdiag(Wi1, Wi2) + [bi1|bi2]), one fused matmul.
    # Runtime arithmetic blend (flag is 0/1) so one kernel binary covers both paths.
    hc_init = jnp.tanh(
        jnp.dot(hc_raw, w_ref[R_WINIT:R_WINIT + 2 * H, :],
                preferred_element_type=jnp.float32) + b_init)[:, 0:2 * H]
    hc = f_init * hc_init + (1.0 - f_init) * hc_raw
    h = hc[:, 0:H]                               # (1, H)
    c = hc[:, H:2 * H]                           # (1, H)

    enc = enc_ref[...]                           # (S, 2H)

    # calcu_weight_1 over cat([h bcast S, enc], dim=1), split by weight rows; the
    # (1,128) hidden term broadcasts over S in the VPU add (no [h]*S stack).
    temp = jnp.tanh(
        jnp.dot(enc, w_ref[R_W1E:R_W1E + 2 * H, :], preferred_element_type=jnp.float32)
        + jnp.dot(h, w_ref[R_W1H:R_W1H + H, :], preferred_element_type=jnp.float32)
        + b1)                                    # (S, 128); padded cols are exactly 0
    # calcu_weight_2 -> (S,1) scores; softmax over source length (dim 0).
    scores = jnp.sum(temp * w2_row, axis=1, keepdims=True) + b2     # (S, 1)
    m = jnp.max(scores, axis=0, keepdims=True)
    e = jnp.exp(scores - m)
    attn = e * pl.reciprocal(jnp.sum(e, axis=0, keepdims=True), approx=False)
    ctx = jnp.sum(attn * enc, axis=0, keepdims=True)                # (1, 2H)

    # Single fused LSTM-gate matmul: x = [ctx | emb | h] (1,128) @ (128, 4H).
    xbuf_ref[:, 0:2 * H] = ctx
    xbuf_ref[:, 2 * H:2 * H + I] = emb
    xbuf_ref[:, 2 * H + I:2 * H + I + H] = h
    gates = jnp.dot(xbuf_ref[...], w_ref[R_WG:R_WG + LANES, :],
                    preferred_element_type=jnp.float32) + b_lstm    # (1, 4H)
    i_g = jax.nn.sigmoid(gates[:, 0 * H:1 * H])
    f_g = jax.nn.sigmoid(gates[:, 1 * H:2 * H])
    g_g = jnp.tanh(gates[:, 2 * H:3 * H])
    o_g = jax.nn.sigmoid(gates[:, 3 * H:4 * H])
    c_new = f_g * c + i_g * g_g
    h_new = o_g * jnp.tanh(c_new)

    # linear_vob + log_softmax(dim=1)
    logits = (jnp.dot(h_new, w_ref[R_WV:R_WV + H, :],
                      preferred_element_type=jnp.float32) + bv)[:, 0:V]
    lmax = jnp.max(logits, axis=1, keepdims=True)
    lse = jnp.log(jnp.sum(jnp.exp(logits - lmax), axis=1, keepdims=True)) + lmax

    # Packed lane-dense output: [log_prob (V) | h_new (H) | c_new (H)] = full 128 lanes.
    out_ref[:, 0:V] = logits - lse
    out_ref[:, V:V + H] = h_new
    out_ref[:, V + H:V + 2 * H] = c_new


@jax.jit
def _decoder_step(packed, input_word_index, hidden_vector, cell_vector,
                  encoder_memory, is_init_flag):
    H, I, V = HIDDEN, INPUT_SIZE, NUM_VOCAB
    h0 = hidden_vector.reshape(1, H).astype(jnp.float32)
    c0 = cell_vector.reshape(1, H).astype(jnp.float32)
    # embedding lookup (gather) is glue; done in plain JAX.
    emb = packed["embedding"][input_word_index].reshape(1, I).astype(jnp.float32)
    flag_f = is_init_flag.astype(jnp.float32).reshape(1, 1)
    pad = jnp.zeros((1, LANES - (F_LANE + 1)), jnp.float32)
    # Single lane-dense dynamic-state row: [h | c | emb | is_init | 0...]
    state = jnp.concatenate([h0, c0, emb, flag_f, pad], axis=1)     # (1, 128)

    vmem = pl.BlockSpec(memory_space=pltpu.MemorySpace.VMEM)
    out = pl.pallas_call(
        _decoder_kernel,
        out_shape=jax.ShapeDtypeStruct((1, OUT_COLS), jnp.float32),
        in_specs=[vmem, vmem, vmem],
        out_specs=vmem,
        scratch_shapes=[pltpu.VMEM((1, LANES), jnp.float32)],
    )(state, encoder_memory.astype(jnp.float32), packed["w_slab"])

    prob = out[:, 0:V]
    h_t = out[:, V:V + H].reshape(1, 1, H)
    c_t = out[:, V + H:V + 2 * H].reshape(1, 1, H)
    return prob, h_t, c_t


def lstm_decoder_with_attention(packed, input_word_index, hidden_vector,
                                cell_vector, encoder_memory, is_init=False):
    """Mirrors LSTM_Decoder_With_Attention.forward.

    hidden_vector / cell_vector: (1, 1, H)   encoder_memory: (S, 2H)
    Returns (log_prob (1, V), h_t (1, 1, H), c_t (1, 1, H)).
    """
    flag = jnp.asarray(is_init, dtype=jnp.int32)
    return _decoder_step(packed, input_word_index, hidden_vector, cell_vector,
                         encoder_memory, flag)


def init_params(key):
    H, I, V = HIDDEN, INPUT_SIZE, NUM_VOCAB
    ks = jax.random.split(key, 16)

    def rand(k, shape, scale=0.1):
        return (scale * jax.random.normal(k, shape)).astype(jnp.float32)

    return {
        "embedding": rand(ks[0], (V, I)),
        # init_weight_1 / init_weight_2 : Linear(H, H), stored (in, out)
        "wi1": rand(ks[1], (H, H)), "bi1": rand(ks[2], (1, H)),
        "wi2": rand(ks[3], (H, H)), "bi2": rand(ks[4], (1, H)),
        # calcu_weight_1 : Linear(3H, H), split by input rows: [hidden | enc]
        "w1h": rand(ks[5], (H, H)), "w1e": rand(ks[6], (2 * H, H)),
        "b1": rand(ks[7], (1, H)),
        # calcu_weight_2 : Linear(H, 1) -> weight stored as (1, H), bias (1, 1)
        "w2": rand(ks[8], (1, H)), "b2": rand(ks[9], (1, 1)),
        # LSTM: W_ih (in = 2H + I, out = 4H) split [ctx | emb]; W_hh (H, 4H);
        # combined bias b_ih + b_hh as (1, 4H)
        "wih_ctx": rand(ks[10], (2 * H, 4 * H)),
        "wih_emb": rand(ks[11], (I, 4 * H)),
        "whh": rand(ks[12], (H, 4 * H)),
        "blstm": rand(ks[13], (1, 4 * H)),
        # linear_vob : Linear(H, V)
        "wv": rand(ks[14], (H, V)), "bv": rand(ks[15], (1, V)),
    }


def pack_params(params):
    """Pack all weights/biases into one (SLAB_ROWS, 128) f32 slab (single DMA)."""
    H, I, V = HIDDEN, INPUT_SIZE, NUM_VOCAB
    slab = jnp.zeros((SLAB_ROWS, LANES), jnp.float32)
    # block-diagonal init transform: [h|c] @ [[wi1, 0], [0, wi2]] + [bi1 | bi2]
    slab = slab.at[R_WINIT:R_WINIT + H, 0:H].set(params["wi1"])
    slab = slab.at[R_WINIT + H:R_WINIT + 2 * H, H:2 * H].set(params["wi2"])
    slab = slab.at[R_W1H:R_W1H + H, 0:H].set(params["w1h"])
    slab = slab.at[R_W1E:R_W1E + 2 * H, 0:H].set(params["w1e"])
    wg = jnp.concatenate([params["wih_ctx"], params["wih_emb"], params["whh"]],
                         axis=0)                                   # (128, 4H)
    slab = slab.at[R_WG:R_WG + LANES, 0:4 * H].set(wg)
    slab = slab.at[R_WV:R_WV + H, 0:V].set(params["wv"])
    # bias block (rows R_BIAS .. R_BIAS+7)
    slab = slab.at[R_BIAS + 0, 0:H].set(params["bi1"][0])
    slab = slab.at[R_BIAS + 0, H:2 * H].set(params["bi2"][0])
    slab = slab.at[R_BIAS + 1, 0:H].set(params["b1"][0])
    slab = slab.at[R_BIAS + 2, 0:H].set(params["w2"][0])
    slab = slab.at[R_BIAS + 3, 0].set(params["b2"][0, 0])
    slab = slab.at[R_BIAS + 4, 0:4 * H].set(params["blstm"][0])
    slab = slab.at[R_BIAS + 5, 0:V].set(params["bv"][0])
    return {"w_slab": slab, "embedding": params["embedding"]}


def reference(params, input_word_index, hidden_vector, cell_vector,
              encoder_memory, is_init):
    """Pure-JAX replica of the PyTorch forward (for correctness checking)."""
    H, I = HIDDEN, INPUT_SIZE
    h0 = hidden_vector.reshape(1, H)
    c0 = cell_vector.reshape(1, H)
    if is_init:
        h0 = jnp.tanh(h0 @ params["wi1"] + params["bi1"])
        c0 = jnp.tanh(c0 @ params["wi2"] + params["bi2"])
    S = encoder_memory.shape[0]
    nh = jnp.broadcast_to(h0, (S, H))
    com = jnp.concatenate([nh, encoder_memory], axis=1)                 # (S, 3H)
    w1 = jnp.concatenate([params["w1h"], params["w1e"]], axis=0)        # (3H, H)
    temp = jnp.tanh(com @ w1 + params["b1"])                            # (S, H)
    scores = temp @ params["w2"].T + params["b2"]                       # (S, 1)
    attn = jax.nn.softmax(scores, axis=0)
    ctx = attn.T @ encoder_memory                                       # (1, 2H)
    emb = params["embedding"][input_word_index].reshape(1, I)
    x = jnp.concatenate([ctx, emb], axis=1)                             # (1, 2H+I)
    wih = jnp.concatenate([params["wih_ctx"], params["wih_emb"]], axis=0)
    gates = x @ wih + h0 @ params["whh"] + params["blstm"]              # (1, 4H)
    i_g = jax.nn.sigmoid(gates[:, 0 * H:1 * H])
    f_g = jax.nn.sigmoid(gates[:, 1 * H:2 * H])
    g_g = jnp.tanh(gates[:, 2 * H:3 * H])
    o_g = jax.nn.sigmoid(gates[:, 3 * H:4 * H])
    c_new = f_g * c0 + i_g * g_g
    h_new = o_g * jnp.tanh(c_new)
    logits = h_new @ params["wv"] + params["bv"]
    logp = jax.nn.log_softmax(logits, axis=1)
    return logp, h_new.reshape(1, 1, H), c_new.reshape(1, 1, H)


if __name__ == "__main__":
    key = jax.random.PRNGKey(0)
    pkey, dkey = jax.random.split(key)
    params = init_params(pkey)
    packed = pack_params(params)

    k1, k2, k3 = jax.random.split(dkey, 3)
    hidden_vector = (0.1 * jax.random.normal(k1, (1, 1, HIDDEN))).astype(jnp.float32)
    cell_vector = (0.1 * jax.random.normal(k2, (1, 1, HIDDEN))).astype(jnp.float32)
    encoder_memory = (0.1 * jax.random.normal(k3, (SRC_LEN, 2 * HIDDEN))).astype(jnp.float32)
    input_word_index = jnp.int32(5)

    for is_init in (True, False):
        prob, h_t, c_t = lstm_decoder_with_attention(
            packed, input_word_index, hidden_vector, cell_vector, encoder_memory,
            is_init=is_init)
        jax.block_until_ready((prob, h_t, c_t))

        ref_prob, ref_h, ref_c = reference(
            params, input_word_index, hidden_vector, cell_vector, encoder_memory,
            is_init)

        assert prob.shape == (1, NUM_VOCAB) and h_t.shape == (1, 1, HIDDEN)
        assert jnp.allclose(prob, ref_prob, atol=1e-5, rtol=1e-5), "log-prob mismatch"
        assert jnp.allclose(h_t, ref_h, atol=1e-5, rtol=1e-5), "h_t mismatch"
        assert jnp.allclose(c_t, ref_c, atol=1e-5, rtol=1e-5), "c_t mismatch"

    print("KERNEL_OK")
</pallas_src>

<mosaic_0001>
module attributes {stable_mosaic.version = 11 : i64} {
  func.func @_decoder_kernel(%arg0: memref<1x128xf32, #tpu.memory_space<vmem>>, %arg1: memref<8x64xf32, #tpu.memory_space<vmem>>, %arg2: memref<328x128xf32, #tpu.memory_space<vmem>>, %arg3: memref<1x128xf32, #tpu.memory_space<vmem>>, %arg4: memref<1x128xf32, #tpu.memory_space<vmem>>) attributes {dimension_semantics = [], scalar_prefetch = 0 : i64, scratch_operands = 1 : i64, tpu.core_type = #tpu.core_type<tc>} {
    %c0 = arith.constant 0 : index
    %c0_0 = arith.constant 0 : index
    %0 = vector.load %arg0[%c0, %c0_0] : memref<1x128xf32, #tpu.memory_space<vmem>>, vector<1x128xf32>
    %1 = vector.extract_strided_slice %0 {offsets = [0, 0], sizes = [1, 64], strides = [1, 1]} : vector<1x128xf32> to vector<1x64xf32>
    %2 = vector.extract_strided_slice %0 {offsets = [0, 64], sizes = [1, 32], strides = [1, 1]} : vector<1x128xf32> to vector<1x32xf32>
    %3 = vector.extract_strided_slice %0 {offsets = [0, 96], sizes = [1, 1], strides = [1, 1]} : vector<1x128xf32> to vector<1x1xf32>
    %c320 = arith.constant 320 : index
    %c0_1 = arith.constant 0 : index
    %4 = vector.load %arg2[%c320, %c0_1] : memref<328x128xf32, #tpu.memory_space<vmem>>, vector<8x128xf32>
    %5 = vector.extract_strided_slice %4 {offsets = [0, 0], sizes = [1, 128], strides = [1, 1]} : vector<8x128xf32> to vector<1x128xf32>
    %6 = vector.extract_strided_slice %4 {offsets = [1, 0], sizes = [1, 128], strides = [1, 1]} : vector<8x128xf32> to vector<1x128xf32>
    %7 = vector.extract_strided_slice %4 {offsets = [2, 0], sizes = [1, 128], strides = [1, 1]} : vector<8x128xf32> to vector<1x128xf32>
    %8 = vector.extract_strided_slice %4 {offsets = [3, 0], sizes = [1, 1], strides = [1, 1]} : vector<8x128xf32> to vector<1x1xf32>
    %9 = vector.extract_strided_slice %4 {offsets = [4, 0], sizes = [1, 128], strides = [1, 1]} : vector<8x128xf32> to vector<1x128xf32>
    %10 = vector.extract_strided_slice %4 {offsets = [5, 0], sizes = [1, 128], strides = [1, 1]} : vector<8x128xf32> to vector<1x128xf32>
    %c0_2 = arith.constant 0 : index
    %c0_3 = arith.constant 0 : index
    %11 = vector.load %arg2[%c0_2, %c0_3] : memref<328x128xf32, #tpu.memory_space<vmem>>, vector<64x128xf32>
    %cst = arith.constant dense<0.000000e+00> : vector<1x128xf32>
    %12 = tpu.matmul %1, %11, %cst {dimension_numbers = #tpu.dot_dimension_numbers<[1], [0], [0], [1], [0, 0, 1, 1], [], []>} : vector<1x64xf32>, vector<64x128xf32>, vector<1x128xf32> -> vector<1x128xf32>
    %13 = arith.addf %12, %5 : vector<1x128xf32>
    %14 = math.tanh %13 : vector<1x128xf32>
    %15 = vector.extract_strided_slice %14 {offsets = [0, 0], sizes = [1, 64], strides = [1, 1]} : vector<1x128xf32> to vector<1x64xf32>
    %16 = vector.broadcast %3 : vector<1x1xf32> to vector<1x64xf32>
    %17 = arith.mulf %16, %15 : vector<1x64xf32>
    %cst_4 = arith.constant 1.000000e+00 : f32
    %18 = vector.broadcast %cst_4 : f32 to vector<1x1xf32>
    %19 = arith.subf %18, %3 : vector<1x1xf32>
    %20 = vector.broadcast %19 : vector<1x1xf32> to vector<1x64xf32>
    %21 = arith.mulf %20, %1 : vector<1x64xf32>
    %22 = arith.addf %17, %21 : vector<1x64xf32>
    %23 = vector.extract_strided_slice %22 {offsets = [0, 0], sizes = [1, 32], strides = [1, 1]} : vector<1x64xf32> to vector<1x32xf32>
    %24 = vector.extract_strided_slice %22 {offsets = [0, 32], sizes = [1, 32], strides = [1, 1]} : vector<1x64xf32> to vector<1x32xf32>
    %c0_5 = arith.constant 0 : index
    %c0_6 = arith.constant 0 : index
    %25 = vector.load %arg1[%c0_5, %c0_6] : memref<8x64xf32, #tpu.memory_space<vmem>>, vector<8x64xf32>
    %c96 = arith.constant 96 : index
    %c0_7 = arith.constant 0 : index
    %26 = vector.load %arg2[%c96, %c0_7] : memref<328x128xf32, #tpu.memory_space<vmem>>, vector<64x128xf32>
    %cst_8 = arith.constant dense<0.000000e+00> : vector<8x128xf32>
    %27 = tpu.matmul %25, %26, %cst_8 {dimension_numbers = #tpu.dot_dimension_numbers<[1], [0], [0], [1], [0, 0, 1, 1], [], []>} : vector<8x64xf32>, vector<64x128xf32>, vector<8x128xf32> -> vector<8x128xf32>
    %c64 = arith.constant 64 : index
    %c0_9 = arith.constant 0 : index
    %28 = vector.load %arg2[%c64, %c0_9] : memref<328x128xf32, #tpu.memory_space<vmem>>, vector<32x128xf32>
    %cst_10 = arith.constant dense<0.000000e+00> : vector<1x128xf32>
    %29 = tpu.matmul %23, %28, %cst_10 {dimension_numbers = #tpu.dot_dimension_numbers<[1], [0], [0], [1], [0, 0, 1, 1], [], []>} : vector<1x32xf32>, vector<32x128xf32>, vector<1x128xf32> -> vector<1x128xf32>
    %30 = vector.broadcast %29 : vector<1x128xf32> to vector<8x128xf32>
    %31 = arith.addf %27, %30 : vector<8x128xf32>
    %32 = vector.broadcast %6 : vector<1x128xf32> to vector<8x128xf32>
    %33 = arith.addf %31, %32 : vector<8x128xf32>
    %34 = math.tanh %33 : vector<8x128xf32>
    %35 = vector.broadcast %7 : vector<1x128xf32> to vector<8x128xf32>
    %36 = arith.mulf %34, %35 : vector<8x128xf32>
    %cst_11 = arith.constant dense<0.000000e+00> : vector<8xf32>
    %37 = vector.multi_reduction <add>, %36, %cst_11 [1] : vector<8x128xf32> to vector<8xf32>
    %38 = vector.shape_cast %37 : vector<8xf32> to vector<8x1xf32>
    %39 = vector.broadcast %8 : vector<1x1xf32> to vector<8x1xf32>
    %40 = arith.addf %38, %39 : vector<8x1xf32>
    %cst_12 = arith.constant dense<0xFF800000> : vector<1xf32>
    %41 = vector.multi_reduction <maximumf>, %40, %cst_12 [0] : vector<8x1xf32> to vector<1xf32>
    %42 = vector.shape_cast %41 : vector<1xf32> to vector<1x1xf32>
    %43 = vector.broadcast %42 : vector<1x1xf32> to vector<8x1xf32>
    %44 = arith.subf %40, %43 : vector<8x1xf32>
    %45 = math.exp %44 : vector<8x1xf32>
    %cst_13 = arith.constant dense<0.000000e+00> : vector<1xf32>
    %46 = vector.multi_reduction <add>, %45, %cst_13 [0] : vector<8x1xf32> to vector<1xf32>
    %47 = vector.shape_cast %46 : vector<1xf32> to vector<1x1xf32>
    %48 = tpu.reciprocal %47 : vector<1x1xf32> -> vector<1x1xf32>
    %49 = vector.broadcast %48 : vector<1x1xf32> to vector<8x1xf32>
    %50 = arith.mulf %45, %49 : vector<8x1xf32>
    %51 = vector.broadcast %50 : vector<8x1xf32> to vector<8x64xf32>
    %52 = arith.mulf %51, %25 : vector<8x64xf32>
    %cst_14 = arith.constant dense<0.000000e+00> : vector<64xf32>
    %53 = vector.multi_reduction <add>, %52, %cst_14 [0] : vector<8x64xf32> to vector<64xf32>
    %54 = vector.shape_cast %53 : vector<64xf32> to vector<1x64xf32>
    %c0_15 = arith.constant 0 : index
    %c0_16 = arith.constant 0 : index
    %55 = vector.load %arg4[%c0_15, %c0_16] : memref<1x128xf32, #tpu.memory_space<vmem>>, vector<1x64xf32>
    tpu.vector_store %arg4[%c0_15, %c0_16], %54 {strides = array<i32>} : memref<1x128xf32, #tpu.memory_space<vmem>>, vector<1x64xf32>,
    %c0_17 = arith.constant 0 : index
    %c64_18 = arith.constant 64 : index
    %56 = vector.load %arg4[%c0_17, %c64_18] : memref<1x128xf32, #tpu.memory_space<vmem>>, vector<1x32xf32>
    tpu.vector_store %arg4[%c0_17, %c64_18], %2 {strides = array<i32>} : memref<1x128xf32, #tpu.memory_space<vmem>>, vector<1x32xf32>,
    %c0_19 = arith.constant 0 : index
    %c96_20 = arith.constant 96 : index
    %57 = vector.load %arg4[%c0_19, %c96_20] : memref<1x128xf32, #tpu.memory_space<vmem>>, vector<1x32xf32>
    tpu.vector_store %arg4[%c0_19, %c96_20], %23 {strides = array<i32>} : memref<1x128xf32, #tpu.memory_space<vmem>>, vector<1x32xf32>,
    %c0_21 = arith.constant 0 : index
    %c0_22 = arith.constant 0 : index
    %58 = vector.load %arg4[%c0_21, %c0_22] : memref<1x128xf32, #tpu.memory_space<vmem>>, vector<1x128xf32>
    %c160 = arith.constant 160 : index
    %c0_23 = arith.constant 0 : index
    %59 = vector.load %arg2[%c160, %c0_23] : memref<328x128xf32, #tpu.memory_space<vmem>>, vector<128x128xf32>
    %cst_24 = arith.constant dense<0.000000e+00> : vector<1x128xf32>
    %60 = tpu.matmul %58, %59, %cst_24 {dimension_numbers = #tpu.dot_dimension_numbers<[1], [0], [0], [1], [0, 0, 1, 1], [], []>} : vector<1x128xf32>, vector<128x128xf32>, vector<1x128xf32> -> vector<1x128xf32>
    %61 = arith.addf %60, %9 : vector<1x128xf32>
    %62 = vector.extract_strided_slice %61 {offsets = [0, 0], sizes = [1, 32], strides = [1, 1]} : vector<1x128xf32> to vector<1x32xf32>
    %63 = arith.negf %62 : vector<1x32xf32>
    %64 = math.exp %63 : vector<1x32xf32>
    %cst_25 = arith.constant 1.000000e+00 : f32
    %65 = vector.broadcast %cst_25 : f32 to vector<1x32xf32>
    %66 = arith.addf %65, %64 : vector<1x32xf32>
    %67 = arith.divf %65, %66 : vector<1x32xf32>
    %68 = vector.extract_strided_slice %61 {offsets = [0, 32], sizes = [1, 32], strides = [1, 1]} : vector<1x128xf32> to vector<1x32xf32>
    %69 = arith.negf %68 : vector<1x32xf32>
    %70 = math.exp %69 : vector<1x32xf32>
    %cst_26 = arith.constant 1.000000e+00 : f32
    %71 = vector.broadcast %cst_26 : f32 to vector<1x32xf32>
    %72 = arith.addf %71, %70 : vector<1x32xf32>
    %73 = arith.divf %71, %72 : vector<1x32xf32>
    %74 = vector.extract_strided_slice %61 {offsets = [0, 64], sizes = [1, 32], strides = [1, 1]} : vector<1x128xf32> to vector<1x32xf32>
    %75 = math.tanh %74 : vector<1x32xf32>
    %76 = vector.extract_strided_slice %61 {offsets = [0, 96], sizes = [1, 32], strides = [1, 1]} : vector<1x128xf32> to vector<1x32xf32>
    %77 = arith.negf %76 : vector<1x32xf32>
    %78 = math.exp %77 : vector<1x32xf32>
    %cst_27 = arith.constant 1.000000e+00 : f32
    %79 = vector.broadcast %cst_27 : f32 to vector<1x32xf32>
    %80 = arith.addf %79, %78 : vector<1x32xf32>
    %81 = arith.divf %79, %80 : vector<1x32xf32>
    %82 = arith.mulf %73, %24 : vector<1x32xf32>
    %83 = arith.mulf %67, %75 : vector<1x32xf32>
    %84 = arith.addf %82, %83 : vector<1x32xf32>
    %85 = math.tanh %84 : vector<1x32xf32>
    %86 = arith.mulf %81, %85 : vector<1x32xf32>
    %c288 = arith.constant 288 : index
    %c0_28 = arith.constant 0 : index
    %87 = vector.load %arg2[%c288, %c0_28] : memref<328x128xf32, #tpu.memory_space<vmem>>, vector<32x128xf32>
    %cst_29 = arith.constant dense<0.000000e+00> : vector<1x128xf32>
    %88 = tpu.matmul %86, %87, %cst_29 {dimension_numbers = #tpu.dot_dimension_numbers<[1], [0], [0], [1], [0, 0, 1, 1], [], []>} : vector<1x32xf32>, vector<32x128xf32>, vector<1x128xf32> -> vector<1x128xf32>
    %89 = arith.addf %88, %10 : vector<1x128xf32>
    %90 = vector.extract_strided_slice %89 {offsets = [0, 0], sizes = [1, 64], strides = [1, 1]} : vector<1x128xf32> to vector<1x64xf32>
    %cst_30 = arith.constant dense<0xFF800000> : vector<1xf32>
    %91 = vector.multi_reduction <maximumf>, %90, %cst_30 [1] : vector<1x64xf32> to vector<1xf32>
    %92 = vector.shape_cast %91 : vector<1xf32> to vector<1x1xf32>
    %93 = vector.broadcast %92 : vector<1x1xf32> to vector<1x64xf32>
    %94 = arith.subf %90, %93 : vector<1x64xf32>
    %95 = math.exp %94 : vector<1x64xf32>
    %cst_31 = arith.constant dense<0.000000e+00> : vector<1xf32>
    %96 = vector.multi_reduction <add>, %95, %cst_31 [1] : vector<1x64xf32> to vector<1xf32>
    %97 = vector.shape_cast %96 : vector<1xf32> to vector<1x1xf32>
    %98 = math.log %97 : vector<1x1xf32>
    %99 = arith.addf %98, %92 : vector<1x1xf32>
    %100 = vector.broadcast %99 : vector<1x1xf32> to vector<1x64xf32>
    %101 = arith.subf %90, %100 : vector<1x64xf32>
    %c0_32 = arith.constant 0 : index
    %c0_33 = arith.constant 0 : index
    %102 = vector.load %arg3[%c0_32, %c0_33] : memref<1x128xf32, #tpu.memory_space<vmem>>, vector<1x64xf32>
    tpu.vector_store %arg3[%c0_32, %c0_33], %101 {strides = array<i32>} : memref<1x128xf32, #tpu.memory_space<vmem>>, vector<1x64xf32>,
    %c0_34 = arith.constant 0 : index
    %c64_35 = arith.constant 64 : index
    %103 = vector.load %arg3[%c0_34, %c64_35] : memref<1x128xf32, #tpu.memory_space<vmem>>, vector<1x32xf32>
    tpu.vector_store %arg3[%c0_34, %c64_35], %86 {strides = array<i32>} : memref<1x128xf32, #tpu.memory_space<vmem>>, vector<1x32xf32>,
    %c0_36 = arith.constant 0 : index
    %c96_37 = arith.constant 96 : index
    %104 = vector.load %arg3[%c0_36, %c96_37] : memref<1x128xf32, #tpu.memory_space<vmem>>, vector<1x32xf32>
    tpu.vector_store %arg3[%c0_36, %c96_37], %84 {strides = array<i32>} : memref<1x128xf32, #tpu.memory_space<vmem>>, vector<1x32xf32>,
    return
  }
}

</mosaic_0001>

<llo_original>
// kernel: _decoder_step.1
$region0: #{_decoder_step.1}
  #allocation0 [shape = 'u32[]', space=smem, size = 0x4, offset = 0x4, fixed_abs, tag = 'smem constant byte address 0x4 - core index']
  #allocation1 [shape = 'u32[144,128]{1,0:T(1,128)}', space=vmem, size = 0x12000, scoped, tag = 'internal scratch']
  #allocation2 [shape = 'f32[1,128]{1,0:T(1,128)}', space=vmem, size = 0x200, scoped, tag = 'scratch operand']
  %s0 = inlined_call_operand.vmem [shape: f32[1,128], index: 0, kind: input, shape index: {}]
  %s1 = inlined_call_operand.vmem [shape: f32[8,64], index: 1, kind: input, shape index: {}]
  %s2 = inlined_call_operand.hbm [shape: f32[328,128], index: 2, kind: input, shape index: {}]
  %s3 = inlined_call_operand.vmem [shape: f32[1,128], index: 3, kind: output, shape index: {}]
  %s4 = sld [smem:[#allocation0]]
  $region26: #{_decoder_step.1} parent=0
    _
  %s6 = ssub.s32 1, %s4
  %s7 = scalar_select 0, %s6, %s4
  $region1: #{_decoder_step.1} parent=0
    #allocation3 [shape = 'u8[167936]{0}', space=vmem, size = 0x29000, scoped, tag = 'input window, operand 2, single buffered']
    #allocation4 [shape = 's32[1]{0}', space=sflag, size = 0x4, scoped, tag = 'scoped memory for _decoder_step.1']
    %8 = vsyncpa [#allocation4], 0
    // Predicated region
    $region2: #{_decoder_step.1} parent=1 // pred_check
      _
    $region3: #{_decoder_step.1} parent=1 // pred_check_branch
      %10 = sbr.rel (0) target = $region5
    $region4: #{_decoder_step.1} parent=1 // pred_region
      _
    $region5: #{_decoder_step.1} parent=1 // pred_fallthru
      _
    // Predicated region
    $region6: #{_decoder_step.1} parent=1 // pred_check
      _
    $region7: #{_decoder_step.1} parent=1 // pred_check_branch
      %12 = sbr.rel (0) target = $region9
    $region8: #{_decoder_step.1} parent=1 // pred_region
      _
    $region9: #{_decoder_step.1} parent=1 // pred_fallthru
      _
    // Predicated region
    $region10: #{_decoder_step.1} parent=1 // pred_check
      _
    $region11: #{_decoder_step.1} parent=1 // pred_check_branch
      %14 = sbr.rel (0) target = $region13
    $region12: #{_decoder_step.1} parent=1 // pred_region
      %s16 = ssub.s32 5248, 5248
      %17 = vsyncadd [#allocation4], %s16
      %s18 = sshll.u32 [#allocation3], 4
      %s19 = int_to_ptr.vmem [resolvable:$true] %s18
      %24 = dma.hbm_to_vmem [thread:$0]  %s2, 5248, %s19, [#allocation4], 128, 128, 8
    $region13: #{_decoder_step.1} parent=1 // pred_fallthru
      _
    // Predicated region
    $region14: #{_decoder_step.1} parent=1 // pred_check
      _
    $region15: #{_decoder_step.1} parent=1 // pred_check_branch
      %26 = sbr.rel (0) target = $region17
    $region16: #{_decoder_step.1} parent=1 // pred_region
      %27 = dma.done [#allocation4], 5248
    $region17: #{_decoder_step.1} parent=1 // pred_fallthru
      _
    %v28 = vld [vmem:[%s0] sm:$0x1]
    %v29 = vld [vmem:[#allocation3 + $0x140] sm:$0xff]
    %v30 = vld [vmem:[#allocation3] sm:$0xff]
    %v31 = vld [vmem:[#allocation3 + $0x8] sm:$0xff]
    %v32 = vld [vmem:[#allocation3 + $0x10] sm:$0xff]
    %v33 = vld [vmem:[#allocation3 + $0x18] sm:$0xff]
    %v34 = vld [vmem:[#allocation3 + $0x20] sm:$0xff]
    %v35 = vld [vmem:[#allocation3 + $0x28] sm:$0xff]
    %v36 = vld [vmem:[#allocation3 + $0x30] sm:$0xff]
    %v37 = vld [vmem:[#allocation3 + $0x38] sm:$0xff]
    %vm38 = vcmask 523264
    %v40 = vsel %vm38, %v28, 0
    %42 = vmatprep.subr.mxu0 0.0
    %43 = vmatpush1.msra.mxu0 0.0
    %44 = vmatprep.subr.mxu0 0.0
    %45 = vmatpush1.msra.mxu0 0.0
    %46 = vmatprep.subr.mxu0 0.0
    %47 = vmatpush1.msra.mxu0 0.0
    %48 = vmatprep.subr.mxu0 0.0
    %49 = vmatpush1.msra.mxu0 0.0
    %50 = vmatprep.subr.mxu0 0.0
    %51 = vmatpush1.msra.mxu0 0.0
    %52 = vmatprep.subr.mxu0 0.0
    %53 = vmatpush1.msra.mxu0 0.0
    %54 = vmatprep.subr.mxu0 0.0
    %55 = vmatpush1.msra.mxu0 0.0
    %56 = vmatprep.subr.mxu0 0.0
    %57 = vmatpush1.msra.mxu0 0.0
    %58 = vmatprep.subr.mxu0 0.0
    %59 = vmatpush1.msra.mxu0 %v37
    %60 = vmatprep.subr.mxu0 0.0
    %61 = vmatpush1.msra.mxu0 %v36
    %62 = vmatprep.subr.mxu0 0.0
    %63 = vmatpush1.msra.mxu0 %v35
    %64 = vmatprep.subr.mxu0 0.0
    %65 = vmatpush1.msra.mxu0 %v34
    %66 = vmatprep.subr.mxu0 0.0
    %67 = vmatpush1.msra.mxu0 %v33
    %68 = vmatprep.subr.mxu0 0.0
    %69 = vmatpush1.msra.mxu0 %v32
    %70 = vmatprep.subr.mxu0 0.0
    %71 = vmatpush1.msra.mxu0 %v31
    %72 = vmatprep.subr.mxu0 0.0
    %73 = vmatpush1.msra.mxu0 %v30
    %74 = vmatprep.subr.mxu0 0.0
    %75 = vmatpush2.msra.mxu0 0.0
    %76 = vmatprep.subr.mxu0 0.0
    %77 = vmatpush2.msra.mxu0 0.0
    %78 = vmatprep.subr.mxu0 0.0
    %79 = vmatpush2.msra.mxu0 0.0
    %80 = vmatprep.subr.mxu0 0.0
    %81 = vmatpush2.msra.mxu0 0.0
    %82 = vmatprep.subr.mxu0 0.0
    %83 = vmatpush2.msra.mxu0 0.0
    %84 = vmatprep.subr.mxu0 0.0
    %85 = vmatpush2.msra.mxu0 0.0
    %86 = vmatprep.subr.mxu0 0.0
    %87 = vmatpush2.msra.mxu0 0.0
    %88 = vmatprep.subr.mxu0 0.0
    %89 = vmatpush2.msra.mxu0 0.0
    %90 = vmatprep.subr.mxu0 0.0
    %91 = vmatpush2.msra.mxu0 0.0
    %92 = vmatprep.subr.mxu0 0.0
    %93 = vmatpush2.msra.mxu0 0.0
    %94 = vmatprep.subr.mxu0 0.0
    %95 = vmatpush2.msra.mxu0 0.0
    %96 = vmatprep.subr.mxu0 0.0
    %97 = vmatpush2.msra.mxu0 0.0
    %98 = vmatprep.subr.mxu0 0.0
    %99 = vmatpush2.msra.mxu0 0.0
    %100 = vmatprep.subr.mxu0 0.0
    %101 = vmatpush2.msra.mxu0 0.0
    %102 = vmatprep.subr.mxu0 0.0
    %103 = vmatpush2.msra.mxu0 0.0
    %104 = vmatprep.subr.mxu0 0.0
    %105 = vmatpush2.msra.mxu0 0.0
    %106 = vmatprep.mubr.f32.mxu0 0.0
    %107 = vmatmul.mubr.f32.gmra.mxu0 %v40
    %v108 = vpop.f32.mrf.mxu0
    %v109 = vadd.f32 %v29, %v108
    %v110 = vpop.f32.mrf.mxu0
    %111 = vdwg.mxu0
    %v112 = vtanh.pop %v109
    %113 = vset.pattern.permute.xlu0 96
    %114 = vperm.xlu0 %113, %v28
    %v115 = vpop.permute.xlu0 %114
    %v117 = vlaneseq
    %v118 = vshrl.u32 %v117, 7
    %v119 = vsub.s32 0, %v118
    %v120 = vrot.slane %v115, %v119
    %v121 = vmul.f32 %v120, %v112
    %v122 = vsub.f32 1.0, %v28
    %124 = vset.pattern.permute.xlu0 96
    %125 = vperm.xlu0 %124, %v122
    %v126 = vpop.permute.xlu0 %125
    %v128 = vlaneseq
    %v129 = vshrl.u32 %v128, 7
    %v130 = vsub.s32 0, %v129
    %v131 = vrot.slane %v126, %v130
    %v132 = vmul.f32 %v131, %v28
    %v133 = vadd.f32 %v121, %v132
    %v134 = vld [vmem:[%s1] sm:$0xff]
    %v135 = vld [vmem:[#allocation3 + $0x60] sm:$0xff]
    %v136 = vld [vmem:[#allocation3 + $0x68] sm:$0xff]
    %v137 = vld [vmem:[#allocation3 + $0x70] sm:$0xff]
    %v138 = vld [vmem:[#allocation3 + $0x78] sm:$0xff]
    %v139 = vld [vmem:[#allocation3 + $0x80] sm:$0xff]
    %v140 = vld [vmem:[#allocation3 + $0x88] sm:$0xff]
    %v141 = vld [vmem:[#allocation3 + $0x90] sm:$0xff]
    %v142 = vld [vmem:[#allocation3 + $0x98] sm:$0xff]
    %v143 = vld [vmem:[#allocation3 + $0x40] sm:$0xff]
    %v144 = vld [vmem:[#allocation3 + $0x48] sm:$0xff]
    %v145 = vld [vmem:[#allocation3 + $0x50] sm:$0xff]
    %v146 = vld [vmem:[#allocation3 + $0x58] sm:$0xff]
    %vm147 = vcmask 261120
    %v149 = vsel %vm147, %v133, 0
    %151 = vmatprep.subr.mxu0 0.0
    %152 = vmatpush1.msra.mxu0 0.0
    %153 = vmatprep.subr.mxu0 0.0
    %154 = vmatpush1.msra.mxu0 0.0
    %155 = vmatprep.subr.mxu0 0.0
    %156 = vmatpush1.msra.mxu0 0.0
    %157 = vmatprep.subr.mxu0 0.0
    %158 = vmatpush1.msra.mxu0 0.0
    %159 = vmatprep.subr.mxu0 0.0
    %160 = vmatpush1.msra.mxu0 0.0
    %161 = vmatprep.subr.mxu0 0.0
    %162 = vmatpush1.msra.mxu0 0.0
    %163 = vmatprep.subr.mxu0 0.0
    %164 = vmatpush1.msra.mxu0 0.0
    %165 = vmatprep.subr.mxu0 0.0
    %166 = vmatpush1.msra.mxu0 0.0
    %167 = vmatprep.subr.mxu0 0.0
    %168 = vmatpush1.msra.mxu0 0.0
    %169 = vmatprep.subr.mxu0 0.0
    %170 = vmatpush1.msra.mxu0 0.0
    %171 = vmatprep.subr.mxu0 0.0
    %172 = vmatpush1.msra.mxu0 0.0
    %173 = vmatprep.subr.mxu0 0.0
    %174 = vmatpush1.msra.mxu0 0.0
    %175 = vmatprep.subr.mxu0 0.0
    %176 = vmatpush1.msra.mxu0 %v146
    %177 = vmatprep.subr.mxu0 0.0
    %178 = vmatpush1.msra.mxu0 %v145
    %179 = vmatprep.subr.mxu0 0.0
    %180 = vmatpush1.msra.mxu0 %v144
    %181 = vmatprep.subr.mxu0 0.0
    %182 = vmatpush1.msra.mxu0 %v143
    %183 = vmatprep.subr.mxu0 0.0
    %184 = vmatpush2.msra.mxu0 0.0
    %185 = vmatprep.subr.mxu0 0.0
    %186 = vmatpush2.msra.mxu0 0.0
    %187 = vmatprep.subr.mxu0 0.0
    %188 = vmatpush2.msra.mxu0 0.0
    %189 = vmatprep.subr.mxu0 0.0
    %190 = vmatpush2.msra.mxu0 0.0
    %191 = vmatprep.subr.mxu0 0.0
    %192 = vmatpush2.msra.mxu0 0.0
    %193 = vmatprep.subr.mxu0 0.0
    %194 = vmatpush2.msra.mxu0 0.0
    %195 = vmatprep.subr.mxu0 0.0
    %196 = vmatpush2.msra.mxu0 0.0
    %197 = vmatprep.subr.mxu0 0.0
    %198 = vmatpush2.msra.mxu0 0.0
    %199 = vmatprep.subr.mxu0 0.0
    %200 = vmatpush2.msra.mxu0 0.0
    %201 = vmatprep.subr.mxu0 0.0
    %202 = vmatpush2.msra.mxu0 0.0
    %203 = vmatprep.subr.mxu0 0.0
    %204 = vmatpush2.msra.mxu0 0.0
    %205 = vmatprep.subr.mxu0 0.0
    %206 = vmatpush2.msra.mxu0 0.0
    %207 = vmatprep.subr.mxu0 0.0
    %208 = vmatpush2.msra.mxu0 0.0
    %209 = vmatprep.subr.mxu0 0.0
    %210 = vmatpush2.msra.mxu0 0.0
    %211 = vmatprep.subr.mxu0 0.0
    %212 = vmatpush2.msra.mxu0 0.0
    %213 = vmatprep.subr.mxu0 0.0
    %214 = vmatpush2.msra.mxu0 0.0
    %215 = vmatprep.mubr.f32.mxu0 0.0
    %216 = vmatmul.mubr.f32.gmra.mxu0 %v149
    %v217 = vpop.f32.mrf.mxu0
    %v218 = vadd.f32 0.0, %v217
    %v219 = vpop.f32.mrf.mxu0
    %220 = vdwg.mxu0
    %v221 = vlaneseq
    %v222 = vshrl.u32 %v221, 7
    %v223 = vsub.s32 0, %v222
    %v224 = vrot.slane %v218, %v223
    %v226 = vsel %vm38, %v134, 0
    %228 = vmatprep.subr.mxu0 0.0
    %229 = vmatpush1.msra.mxu0 0.0
    %230 = vmatprep.subr.mxu0 0.0
    %231 = vmatpush1.msra.mxu0 0.0
    %232 = vmatprep.subr.mxu0 0.0
    %233 = vmatpush1.msra.mxu0 0.0
    %234 = vmatprep.subr.mxu0 0.0
    %235 = vmatpush1.msra.mxu0 0.0
    %236 = vmatprep.subr.mxu0 0.0
    %237 = vmatpush1.msra.mxu0 0.0
    %238 = vmatprep.subr.mxu0 0.0
    %239 = vmatpush1.msra.mxu0 0.0
    %240 = vmatprep.subr.mxu0 0.0
    %241 = vmatpush1.msra.mxu0 0.0
    %242 = vmatprep.subr.mxu0 0.0
    %243 = vmatpush1.msra.mxu0 0.0
    %244 = vmatprep.subr.mxu0 0.0
    %245 = vmatpush1.msra.mxu0 %v142
    %246 = vmatprep.subr.mxu0 0.0
    %247 = vmatpush1.msra.mxu0 %v141
    %248 = vmatprep.subr.mxu0 0.0
    %249 = vmatpush1.msra.mxu0 %v140
    %250 = vmatprep.subr.mxu0 0.0
    %251 = vmatpush1.msra.mxu0 %v139
    %252 = vmatprep.subr.mxu0 0.0
    %253 = vmatpush1.msra.mxu0 %v138
    %254 = vmatprep.subr.mxu0 0.0
    %255 = vmatpush1.msra.mxu0 %v137
    %256 = vmatprep.subr.mxu0 0.0
    %257 = vmatpush1.msra.mxu0 %v136
    %258 = vmatprep.subr.mxu0 0.0
    %259 = vmatpush1.msra.mxu0 %v135
    %260 = vmatprep.subr.mxu0 0.0
    %261 = vmatpush2.msra.mxu0 0.0
    %262 = vmatprep.subr.mxu0 0.0
    %263 = vmatpush2.msra.mxu0 0.0
    %264 = vmatprep.subr.mxu0 0.0
    %265 = vmatpush2.msra.mxu0 0.0
    %266 = vmatprep.subr.mxu0 0.0
    %267 = vmatpush2.msra.mxu0 0.0
    %268 = vmatprep.subr.mxu0 0.0
    %269 = vmatpush2.msra.mxu0 0.0
    %270 = vmatprep.subr.mxu0 0.0
    %271 = vmatpush2.msra.mxu0 0.0
    %272 = vmatprep.subr.mxu0 0.0
    %273 = vmatpush2.msra.mxu0 0.0
    %274 = vmatprep.subr.mxu0 0.0
    %275 = vmatpush2.msra.mxu0 0.0
    %276 = vmatprep.subr.mxu0 0.0
    %277 = vmatpush2.msra.mxu0 0.0
    %278 = vmatprep.subr.mxu0 0.0
    %279 = vmatpush2.msra.mxu0 0.0
    %280 = vmatprep.subr.mxu0 0.0
    %281 = vmatpush2.msra.mxu0 0.0
    %282 = vmatprep.subr.mxu0 0.0
    %283 = vmatpush2.msra.mxu0 0.0
    %284 = vmatprep.subr.mxu0 0.0
    %285 = vmatpush2.msra.mxu0 0.0
    %286 = vmatprep.subr.mxu0 0.0
    %287 = vmatpush2.msra.mxu0 0.0
    %288 = vmatprep.subr.mxu0 0.0
    %289 = vmatpush2.msra.mxu0 0.0
    %290 = vmatprep.subr.mxu0 0.0
    %291 = vmatpush2.msra.mxu0 0.0
    %292 = vmatprep.mubr.f32.mxu0 0.0
    %293 = vmatmul.mubr.f32.gmra.mxu0 %v226
    %v294 = vpop.f32.mrf.mxu0
    %v295 = vadd.f32 %v224, %v294
    %v296 = vpop.f32.mrf.mxu0
    %297 = vdwg.mxu0
    %v298 = vlaneseq
    %v299 = vshrl.u32 %v298, 7
    %v300 = vsub.s32 1, %v299
    %v301 = vrot.slane %v29, %v300
    %v302 = vadd.f32 %v295, %v301
    %v303 = vtanh.pop %v302
    %v304 = vlaneseq
    %v305 = vshrl.u32 %v304, 7
    %v306 = vsub.s32 2, %v305
    %v307 = vrot.slane %v29, %v306
    %v308 = vmul.f32 %v303, %v307
    %309 = vadd.xlane.f32.xlu0 %v308
    %v310 = vpop.xlane.xlu0 %309
    %v311 = vlaneseq
    %v312 = vshrl.u32 %v311, 7
    %v313 = vsub.s32 3, %v312
    %v314 = vrot.slane %v29, %v313
    %v315 = vadd.f32 %v310, %v314
    %vm316 = vcmask 7168
    %v317 = vsel %vm316, %v315, -inf
    %v318 = vrot.slane %v317, 4
    %v319 = vmax.f32 %v317, %v318
    %v320 = vrot.slane %v319, 2
    %v321 = vmax.f32 %v319, %v320
    %v322 = vrot.slane %v321, 1
    %v323 = vmax.f32 %v321, %v322
    %v324 = vsub.f32 %v315, %v323
    %v325 = vmul.f32 %v324, 1.442695
    %v326 = vpow.pop %v325
    %v327 = vsel %vm316, %v326, 0.0
    %v328 = vrot.slane %v327, 4
    %v329 = vadd.f32 %v327, %v328
    %v330 = vrot.slane %v329, 2
    %v331 = vadd.f32 %v329, %v330
    %v332 = vrot.slane %v331, 1
    %v333 = vadd.f32 %v331, %v332
    %v334 = vrcp.pop %v333
    %v335 = vmul.f32 %v326, %v334
    %337 = vset.pattern.permute.xlu0 0
    %338 = vperm.xlu0 %337, %v335
    %v339 = vpop.permute.xlu0 %338
    %v341 = vmul.f32 %v339, %v134
    %v342 = vsel %vm38, %v341, 0.0
    %v343 = vrot.slane %v342, 4
    %v344 = vadd.f32 %v342, %v343
    %v345 = vrot.slane %v344, 2
    %v346 = vadd.f32 %v344, %v345
    %v347 = vrot.slane %v346, 1
    %v348 = vadd.f32 %v346, %v347
    %vm349 = vcmask 516096
    %350 = vst.msk [vmem:[#allocation2] sm:$0x1] %vm349, %v348
    %vm351 = vcmask 778752
    %352 = vst.msk [vmem:[#allocation2] sm:$0x1] %vm351, %v28
    %353 = vrot.lane.b32.xlu0 %v133, 96
    %v354 = vpop.permute.xlu0 %353
    %vm356 = vcmask 1041152
    %357 = vst.msk [vmem:[#allocation2] sm:$0x1] %vm356, %v354
    %v358 = vld [vmem:[#allocation2] sm:$0x1]
    %v359 = vld [vmem:[#allocation3 + $0xa0] sm:$0xff]
    %v360 = vld [vmem:[#allocation3 + $0xa8] sm:$0xff]
    %v361 = vld [vmem:[#allocation3 + $0xb0] sm:$0xff]
    %v362 = vld [vmem:[#allocation3 + $0xb8] sm:$0xff]
    %v363 = vld [vmem:[#allocation3 + $0xc0] sm:$0xff]
    %v364 = vld [vmem:[#allocation3 + $0xc8] sm:$0xff]
    %v365 = vld [vmem:[#allocation3 + $0xd0] sm:$0xff]
    %v366 = vld [vmem:[#allocation3 + $0xd8] sm:$0xff]
    %v367 = vld [vmem:[#allocation3 + $0xe0] sm:$0xff]
    %v368 = vld [vmem:[#allocation3 + $0xe8] sm:$0xff]
    %v369 = vld [vmem:[#allocation3 + $0xf0] sm:$0xff]
    %v370 = vld [vmem:[#allocation3 + $0xf8] sm:$0xff]
    %v371 = vld [vmem:[#allocation3 + $0x100] sm:$0xff]
    %v372 = vld [vmem:[#allocation3 + $0x108] sm:$0xff]
    %v373 = vld [vmem:[#allocation3 + $0x110] sm:$0xff]
    %v374 = vld [vmem:[#allocation3 + $0x118] sm:$0xff]
    %v376 = vrot.slane %v29, 4
    %378 = vmatprep.subr.mxu0 0.0
    %379 = vmatpush1.msra.mxu0 %v374
    %380 = vmatprep.subr.mxu0 0.0
    %381 = vmatpush1.msra.mxu0 %v373
    %382 = vmatprep.subr.mxu0 0.0
    %383 = vmatpush1.msra.mxu0 %v372
    %384 = vmatprep.subr.mxu0 0.0
    %385 = vmatpush1.msra.mxu0 %v371
    %386 = vmatprep.subr.mxu0 0.0
    %387 = vmatpush1.msra.mxu0 %v370
    %388 = vmatprep.subr.mxu0 0.0
    %389 = vmatpush1.msra.mxu0 %v369
    %390 = vmatprep.subr.mxu0 0.0
    %391 = vmatpush1.msra.mxu0 %v368
    %392 = vmatprep.subr.mxu0 0.0
    %393 = vmatpush1.msra.mxu0 %v367
    %394 = vmatprep.subr.mxu0 0.0
    %395 = vmatpush1.msra.mxu0 %v366
    %396 = vmatprep.subr.mxu0 0.0
    %397 = vmatpush1.msra.mxu0 %v365
    %398 = vmatprep.subr.mxu0 0.0
    %399 = vmatpush1.msra.mxu0 %v364
    %400 = vmatprep.subr.mxu0 0.0
    %401 = vmatpush1.msra.mxu0 %v363
    %402 = vmatprep.subr.mxu0 0.0
    %403 = vmatpush1.msra.mxu0 %v362
    %404 = vmatprep.subr.mxu0 0.0
    %405 = vmatpush1.msra.mxu0 %v361
    %406 = vmatprep.subr.mxu0 0.0
    %407 = vmatpush1.msra.mxu0 %v360
    %408 = vmatprep.subr.mxu0 0.0
    %409 = vmatpush1.msra.mxu0 %v359
    %410 = vmatprep.subr.mxu0 0.0
    %411 = vmatpush2.msra.mxu0 0.0
    %412 = vmatprep.subr.mxu0 0.0
    %413 = vmatpush2.msra.mxu0 0.0
    %414 = vmatprep.subr.mxu0 0.0
    %415 = vmatpush2.msra.mxu0 0.0
    %416 = vmatprep.subr.mxu0 0.0
    %417 = vmatpush2.msra.mxu0 0.0
    %418 = vmatprep.subr.mxu0 0.0
    %419 = vmatpush2.msra.mxu0 0.0
    %420 = vmatprep.subr.mxu0 0.0
    %421 = vmatpush2.msra.mxu0 0.0
    %422 = vmatprep.subr.mxu0 0.0
    %423 = vmatpush2.msra.mxu0 0.0
    %424 = vmatprep.subr.mxu0 0.0
    %425 = vmatpush2.msra.mxu0 0.0
    %426 = vmatprep.subr.mxu0 0.0
    %427 = vmatpush2.msra.mxu0 0.0
    %428 = vmatprep.subr.mxu0 0.0
    %429 = vmatpush2.msra.mxu0 0.0
    %430 = vmatprep.subr.mxu0 0.0
    %431 = vmatpush2.msra.mxu0 0.0
    %432 = vmatprep.subr.mxu0 0.0
    %433 = vmatpush2.msra.mxu0 0.0
    %434 = vmatprep.subr.mxu0 0.0
    %435 = vmatpush2.msra.mxu0 0.0
    %436 = vmatprep.subr.mxu0 0.0
    %437 = vmatpush2.msra.mxu0 0.0
    %438 = vmatprep.subr.mxu0 0.0
    %439 = vmatpush2.msra.mxu0 0.0
    %440 = vmatprep.subr.mxu0 0.0
    %441 = vmatpush2.msra.mxu0 0.0
    %442 = vmatprep.mubr.f32.mxu0 0.0
    %443 = vmatmul.mubr.f32.gmra.mxu0 %v358
    %v444 = vpop.f32.mrf.mxu0
    %v445 = vadd.f32 %v376, %v444
    %v446 = vpop.f32.mrf.mxu0
    %447 = vdwg.mxu0
    %v448 = vxor.u32 %v445, 2147483648
    %v449 = vmul.f32 %v448, 1.442695
    %v450 = vpow.pop %v449
    %v451 = vadd.f32 %v450, 1.0
    %v452 = vrcp.pop %v451
    %v453 = vmul.f32 1.0, %v452
    %v454 = vtanh.pop %v445
    %v455 = vmul.f32 %v453, %v133
    %457 = vrot.lane.b32.xlu0 %v454, 64
    %v458 = vpop.permute.xlu0 %457
    %v460 = vmul.f32 %v453, %v458
    %462 = vrot.lane.b32.xlu0 %v460, 32
    %v463 = vpop.permute.xlu0 %462
    %v465 = vadd.f32 %v455, %v463
    %v466 = vtanh.pop %v465
    %468 = vrot.lane.b32.xlu0 %v466, 64
    %v469 = vpop.permute.xlu0 %468
    %v471 = vmul.f32 %v453, %v469
    %v472 = vld [vmem:[#allocation3 + $0x120] sm:$0xff]
    %v473 = vld [vmem:[#allocation3 + $0x128] sm:$0xff]
    %v474 = vld [vmem:[#allocation3 + $0x130] sm:$0xff]
    %v475 = vld [vmem:[#allocation3 + $0x138] sm:$0xff]
    %477 = vrot.lane.b32.xlu0 %v471, 32
    %v478 = vpop.permute.xlu0 %477
    %v479 = vrot.slane %v29, 5
    %v481 = vsel %vm147, %v478, 0
    %483 = vmatprep.subr.mxu0 0.0
    %484 = vmatpush1.msra.mxu0 0.0
    %485 = vmatprep.subr.mxu0 0.0
    %486 = vmatpush1.msra.mxu0 0.0
    %487 = vmatprep.subr.mxu0 0.0
    %488 = vmatpush1.msra.mxu0 0.0
    %489 = vmatprep.subr.mxu0 0.0
    %490 = vmatpush1.msra.mxu0 0.0
    %491 = vmatprep.subr.mxu0 0.0
    %492 = vmatpush1.msra.mxu0 0.0
    %493 = vmatprep.subr.mxu0 0.0
    %494 = vmatpush1.msra.mxu0 0.0
    %495 = vmatprep.subr.mxu0 0.0
    %496 = vmatpush1.msra.mxu0 0.0
    %497 = vmatprep.subr.mxu0 0.0
    %498 = vmatpush1.msra.mxu0 0.0
    %499 = vmatprep.subr.mxu0 0.0
    %500 = vmatpush1.msra.mxu0 0.0
    %501 = vmatprep.subr.mxu0 0.0
    %502 = vmatpush1.msra.mxu0 0.0
    %503 = vmatprep.subr.mxu0 0.0
    %504 = vmatpush1.msra.mxu0 0.0
    %505 = vmatprep.subr.mxu0 0.0
    %506 = vmatpush1.msra.mxu0 0.0
    %507 = vmatprep.subr.mxu0 0.0
    %508 = vmatpush1.msra.mxu0 %v475
    %509 = vmatprep.subr.mxu0 0.0
    %510 = vmatpush1.msra.mxu0 %v474
    %511 = vmatprep.subr.mxu0 0.0
    %512 = vmatpush1.msra.mxu0 %v473
    %513 = vmatprep.subr.mxu0 0.0
    %514 = vmatpush1.msra.mxu0 %v472
    %515 = vmatprep.subr.mxu0 0.0
    %516 = vmatpush2.msra.mxu0 0.0
    %517 = vmatprep.subr.mxu0 0.0
    %518 = vmatpush2.msra.mxu0 0.0
    %519 = vmatprep.subr.mxu0 0.0
    %520 = vmatpush2.msra.mxu0 0.0
    %521 = vmatprep.subr.mxu0 0.0
    %522 = vmatpush2.msra.mxu0 0.0
    %523 = vmatprep.subr.mxu0 0.0
    %524 = vmatpush2.msra.mxu0 0.0
    %525 = vmatprep.subr.mxu0 0.0
    %526 = vmatpush2.msra.mxu0 0.0
    %527 = vmatprep.subr.mxu0 0.0
    %528 = vmatpush2.msra.mxu0 0.0
    %529 = vmatprep.subr.mxu0 0.0
    %530 = vmatpush2.msra.mxu0 0.0
    %531 = vmatprep.subr.mxu0 0.0
    %532 = vmatpush2.msra.mxu0 0.0
    %533 = vmatprep.subr.mxu0 0.0
    %534 = vmatpush2.msra.mxu0 0.0
    %535 = vmatprep.subr.mxu0 0.0
    %536 = vmatpush2.msra.mxu0 0.0
    %537 = vmatprep.subr.mxu0 0.0
    %538 = vmatpush2.msra.mxu0 0.0
    %539 = vmatprep.subr.mxu0 0.0
    %540 = vmatpush2.msra.mxu0 0.0
    %541 = vmatprep.subr.mxu0 0.0
    %542 = vmatpush2.msra.mxu0 0.0
    %543 = vmatprep.subr.mxu0 0.0
    %544 = vmatpush2.msra.mxu0 0.0
    %545 = vmatprep.subr.mxu0 0.0
    %546 = vmatpush2.msra.mxu0 0.0
    %547 = vmatprep.mubr.f32.mxu0 0.0
    %548 = vmatmul.mubr.f32.gmra.mxu0 %v481
    %v549 = vpop.f32.mrf.mxu0
    %v550 = vadd.f32 %v479, %v549
    %v551 = vpop.f32.mrf.mxu0
    %552 = vdwg.mxu0
    %v553 = vsel %vm349, %v550, -inf
    %554 = vmax.xlane.f32.xlu0 %v553
    %v555 = vpop.xlane.xlu0 %554
    %v556 = vsub.f32 %v550, %v555
    %v557 = vmul.f32 %v556, 1.442695
    %v558 = vpow.pop %v557
    %v559 = vsel %vm349, %v558, 0.0
    %560 = vadd.xlane.f32.xlu0 %v559
    %v561 = vpop.xlane.xlu0 %560
    %v562 = vlog2.pop %v561
    %v563 = vmul.f32 %v562, 0.6931472
    %v564 = vadd.f32 %v563, %v555
    %v565 = vsub.f32 %v550, %v564
    %566 = vst.msk [vmem:[%s3] sm:$0x1] %vm349, %v565
    %567 = vrot.lane.b32.xlu0 %v471, 96
    %v568 = vpop.permute.xlu0 %567
    %570 = vst.msk [vmem:[%s3] sm:$0x1] %vm351, %v568
    %572 = vrot.lane.b32.xlu0 %v465, 64
    %v573 = vpop.permute.xlu0 %572
    %575 = vst.msk [vmem:[%s3] sm:$0x1] %vm356, %v573
    // Predicated region
    $region18: #{_decoder_step.1} parent=1 // pred_check
      _
    $region19: #{_decoder_step.1} parent=1 // pred_check_branch
      %577 = sbr.rel (0) target = $region21
    $region20: #{_decoder_step.1} parent=1 // pred_region
      _
    $region21: #{_decoder_step.1} parent=1 // pred_fallthru
      _
    // Predicated region
    $region22: #{_decoder_step.1} parent=1 // pred_check
      _
    $region23: #{_decoder_step.1} parent=1 // pred_check_branch
      %579 = sbr.rel (0) target = $region25
    $region24: #{_decoder_step.1} parent=1 // pred_region
      _
    $region25: #{_decoder_step.1} parent=1 // pred_fallthru
      _
    %580 = vsyncpa [#allocation4], 1

</llo_original>
